<compile_context>
chip_gen: v6e
topology: v6e:2x2x1
jax: 0.10.0
libtpu: 0.0.40
codegen_flags: <defaults>
</compile_context>

<pallas_src>
import functools

import jax
import jax.numpy as jnp
from jax.experimental import pallas as pl
from jax.experimental.pallas import tpu as pltpu


# --------------------------------------------------------------------------
# Hardware detection (per-generation tile / VMEM policy)
# --------------------------------------------------------------------------
def _detect_tpu():
    """Return (vmem_capacity_bytes, tensorcores_per_chip, is_v6, is_v7)."""
    kind = ""
    try:
        kind = jax.devices()[0].device_kind.lower()
    except Exception:
        pass
    is_v7 = ("7x" in kind) or ("v7" in kind)
    is_v6 = ("v6" in kind) or ("trillium" in kind)

    vmem = None
    try:
        vmem = int(pltpu.get_tpu_info().vmem_capacity_bytes)
    except Exception:
        pass
    if vmem is None or vmem <= 0:
        vmem = (64 << 20) if is_v7 else (128 << 20)

    cores = 2 if is_v7 else 1
    return vmem, cores, is_v6, is_v7


def _round_up(x, m):
    return ((x + m - 1) // m) * m


def _cdiv(a, b):
    return -(-a // b)


def _vmem_estimate(tm, tf, E, out_bytes):
    """Explicit VMEM footprint estimate for one pipelined grid step."""
    in_b = 2                                                # bf16 matmul inputs
    inputs = 2 * in_b * (tm * E + E * tf + E * tf + tf * E)  # dbl-buffered x, wg, wu, wd
    outputs = 2 * out_bytes * tm * E                         # dbl-buffered output tile
    acc = 4 * tm * E                                         # f32 accumulator scratch
    temps = 4 * 4 * tm * tf                                  # gate/up/sigmoid/hidden in f32
    return inputs + outputs + acc + temps


def _pick_tiles(M, F, E, hw, out_bytes, tm, tf):
    vmem, cores, is_v6, is_v7 = hw

    if tm is None:
        # Near the compute/bandwidth ridge: v5e ~256, v7x ~256 (64 MiB VMEM), v6e ~512.
        tm_target = 512 if is_v6 else 256
        tm = min(tm_target, _round_up(M, 8))
    tm = max(8, (tm // 8) * 8)

    if tf is None:
        tf_target = 1024 if is_v6 else 512
        tf = F
        for cand in (tf_target, 512, 256, 128):
            if cand <= F and F % cand == 0:
                tf = cand
                break
    assert F % tf == 0, (F, tf)

    # Keep both TensorCores busy on v7x: the row axis is the parallel axis.
    while cores > 1 and _cdiv(M, tm) < cores and tm > 8:
        tm = max(8, (tm // 2 // 8) * 8)

    # Fit within ~70% of physical VMEM (headroom for Mosaic internal scratch).
    budget = int(0.70 * vmem)
    while _vmem_estimate(tm, tf, E, out_bytes) > budget:
        if tf > 128 and tf % 2 == 0 and F % (tf // 2) == 0:
            tf //= 2
        elif tm > 8:
            tm = max(8, (tm // 2 // 8) * 8)
        else:
            break
    return tm, tf


# --------------------------------------------------------------------------
# Kernel
# --------------------------------------------------------------------------
def _mlp_kernel(x_ref, wg_ref, wu_ref, wd_ref, o_ref, acc_ref):
    """One (row-tile i, hidden-tile k) grid step of the fused SwiGLU MLP.

    x_ref:   (tm, E)  bf16 token tile (resident across k)
    wg_ref:  (E, tf)  bf16 gate_proj weight slice k
    wu_ref:  (E, tf)  bf16 up_proj   weight slice k
    wd_ref:  (tf, E)  bf16 down_proj weight slice k
    o_ref:   (tm, E)  output tile (written on the last hidden slice)
    acc_ref: (tm, E)  f32 accumulator over the hidden (k) axis
    """
    k = pl.program_id(1)

    @pl.when(k == 0)
    def _():
        acc_ref[...] = jnp.zeros_like(acc_ref)

    x = x_ref[...]
    gate = jnp.dot(x, wg_ref[...], preferred_element_type=jnp.float32)
    up = jnp.dot(x, wu_ref[...], preferred_element_type=jnp.float32)

    # SwiGLU in f32 on the VPU/EUP: silu(g) * u
    hidden = (gate * jax.nn.sigmoid(gate)) * up

    # Down projection for this hidden slice; accumulate in f32.
    # NOTE: bf16 cast of `hidden` before the down matmul is the intended dtype
    # policy (matches the reference); accumulation stays f32.
    acc_ref[...] += jnp.dot(hidden.astype(wd_ref.dtype), wd_ref[...],
                            preferred_element_type=jnp.float32)

    @pl.when(k == pl.num_programs(1) - 1)
    def _():
        o_ref[...] = acc_ref[...].astype(o_ref.dtype)


@functools.partial(jax.jit, static_argnames=("tm", "tf", "out_dtype", "vmem_limit"))
def _mlp_pallas(x2d, w_gate, w_up, w_down, *, tm, tf, out_dtype, vmem_limit):
    M, E = x2d.shape
    F = w_gate.shape[1]
    Kt = F // tf
    Mp = _round_up(M, tm)

    xb = x2d.astype(jnp.bfloat16)
    if Mp != M:
        # TODO(synk): for very large M, pad only the tail row tile instead of
        # re-writing the whole activation; negligible for weight-dominated shapes.
        xb = jnp.pad(xb, ((0, Mp - M), (0, 0)))

    # No-ops when weights were pre-cast once via prepare_mlp_weights().
    wg = w_gate.astype(jnp.bfloat16)
    wu = w_up.astype(jnp.bfloat16)
    wd = w_down.astype(jnp.bfloat16)

    out = pl.pallas_call(
        _mlp_kernel,
        out_shape=jax.ShapeDtypeStruct((Mp, E), jnp.dtype(out_dtype)),
        grid_spec=pltpu.PrefetchScalarGridSpec(
            num_scalar_prefetch=0,
            grid=(Mp // tm, Kt),
            in_specs=[
                pl.BlockSpec((tm, E), lambda i, k: (i, 0)),   # x row tile
                pl.BlockSpec((E, tf), lambda i, k: (0, k)),   # gate_proj slice k
                pl.BlockSpec((E, tf), lambda i, k: (0, k)),   # up_proj slice k
                pl.BlockSpec((tf, E), lambda i, k: (k, 0)),   # down_proj slice k
            ],
            out_specs=pl.BlockSpec((tm, E), lambda i, k: (i, 0)),
            scratch_shapes=[pltpu.VMEM((tm, E), jnp.float32)],
        ),
        compiler_params=pltpu.CompilerParams(
            dimension_semantics=("parallel", "arbitrary"),
            vmem_limit_bytes=vmem_limit,
        ),
    )(xb, wg, wu, wd)
    # TODO(synk): weight-resident multi-row-tile variant (nested pipeline over i)
    # for v6e when the ridge-sized row tile cannot fit VMEM for very large E.
    return out[:M]


# --------------------------------------------------------------------------
# Public wrappers
# --------------------------------------------------------------------------
def prepare_mlp_weights(w_gate, w_up, w_down):
    """Cast the three projection weights to bf16 ONCE (hoisted out of forward)."""
    bf = jnp.bfloat16
    return w_gate.astype(bf), w_up.astype(bf), w_down.astype(bf)


def mlp_forward(x, w_gate, w_up, w_down, *, out_dtype=None, tm=None, tf=None):
    """out = down_proj(silu(gate_proj(x)) * up_proj(x)).

    x: [B, T, E]; w_gate/w_up: [E, F]; w_down: [F, E] (transpose of nn.Linear.weight)
    Returns [B, T, E] in out_dtype (default: x.dtype).
    """
    B, T, E = x.shape
    F = w_gate.shape[1]
    M = B * T
    out_dt = jnp.dtype(x.dtype if out_dtype is None else out_dtype)

    hw = _detect_tpu()
    tm, tf = _pick_tiles(M, F, E, hw, out_dt.itemsize, tm, tf)

    est = _vmem_estimate(tm, tf, E, out_dt.itemsize)
    vmem_cap = int(0.75 * hw[0])
    vmem_limit = int(min(max(est + (4 << 20), 32 << 20), vmem_cap))

    out2d = _mlp_pallas(x.reshape(M, E), w_gate, w_up, w_down,
                        tm=int(tm), tf=int(tf), out_dtype=out_dt.name,
                        vmem_limit=vmem_limit)
    return out2d.reshape(B, T, E)


# --------------------------------------------------------------------------
# Reference + test
# --------------------------------------------------------------------------
def _reference(x, w_gate, w_up, w_down):
    """Pure-JAX reference mirroring the kernel's dtype policy (bf16 in, f32 acc)."""
    bf = jnp.bfloat16
    xb = x.astype(bf)
    g = jnp.einsum("bte,ef->btf", xb, w_gate.astype(bf),
                   preferred_element_type=jnp.float32)
    u = jnp.einsum("bte,ef->btf", xb, w_up.astype(bf),
                   preferred_element_type=jnp.float32)
    h = (g * jax.nn.sigmoid(g)) * u
    return jnp.einsum("btf,fe->bte", h.astype(bf), w_down.astype(bf),
                      preferred_element_type=jnp.float32)


if __name__ == "__main__":
    # Small config consistent with the module: n_embed=128, n_mlp=256, batch=2, seq=8.
    B, T = 2, 8
    n_embed, n_mlp = 128, 256

    key = jax.random.PRNGKey(0)
    kx, kg, ku, kd = jax.random.split(key, 4)

    # bf16 activations end-to-end (standard TPU policy; also halves output traffic).
    x = jax.random.normal(kx, (B, T, n_embed), dtype=jnp.float32).astype(jnp.bfloat16)
    # Deterministic weight init (kaiming-ish scaling); stored as [in, out].
    w_gate = jax.random.normal(kg, (n_embed, n_mlp), dtype=jnp.float32) * (n_embed ** -0.5)
    w_up = jax.random.normal(ku, (n_embed, n_mlp), dtype=jnp.float32) * (n_embed ** -0.5)
    w_down = jax.random.normal(kd, (n_mlp, n_embed), dtype=jnp.float32) * (n_mlp ** -0.5)

    # Weight prep (bf16 cast) hoisted out of the forward path — done once.
    wg_b, wu_b, wd_b = prepare_mlp_weights(w_gate, w_up, w_down)

    out = mlp_forward(x, wg_b, wu_b, wd_b)
    out = jax.block_until_ready(out)

    ref = _reference(x, w_gate, w_up, w_down)
    assert out.shape == (B, T, n_embed), out.shape
    assert out.dtype == x.dtype, out.dtype
    err = jnp.max(jnp.abs(out.astype(jnp.float32) - ref))
    assert jnp.allclose(out.astype(jnp.float32), ref, atol=3e-2, rtol=3e-2), float(err)

    print("KERNEL_OK")
</pallas_src>

<mosaic_0001>
module attributes {stable_mosaic.version = 11 : i64} {
  func.func @_mlp_kernel(%arg0: i32, %arg1: i32, %arg2: memref<16x128xbf16, #tpu.memory_space<vmem>>, %arg3: memref<128x256xbf16, #tpu.memory_space<vmem>>, %arg4: memref<128x256xbf16, #tpu.memory_space<vmem>>, %arg5: memref<256x128xbf16, #tpu.memory_space<vmem>>, %arg6: memref<16x128xbf16, #tpu.memory_space<vmem>>, %arg7: memref<16x128xf32, #tpu.memory_space<vmem>>) attributes {dimension_semantics = [#tpu.dimension_semantics<parallel>, #tpu.dimension_semantics<arbitrary>], iteration_bounds = array<i64: 1, 1>, scalar_prefetch = 0 : i64, scratch_operands = 1 : i64, tpu.core_type = #tpu.core_type<tc>, window_params = [{transform_indices = @transform_0, window_bounds = array<i64: 16, 128>}, {transform_indices = @transform_1, window_bounds = array<i64: 128, 256>}, {transform_indices = @transform_2, window_bounds = array<i64: 128, 256>}, {transform_indices = @transform_3, window_bounds = array<i64: 256, 128>}, {transform_indices = @transform_4, window_bounds = array<i64: 16, 128>}]} {
    %c0_i32 = arith.constant 0 : i32
    %0 = arith.cmpi eq, %arg1, %c0_i32 : i32
    %1 = arith.extui %0 : i1 to i32
    %c0_i32_0 = arith.constant 0 : i32
    %2 = arith.cmpi ne, %1, %c0_i32_0 : i32
    scf.if %2 {
      %cst_17 = arith.constant 0.000000e+00 : f32
      %24 = vector.broadcast %cst_17 : f32 to vector<16x128xf32>
      %c0_18 = arith.constant 0 : index
      %c0_19 = arith.constant 0 : index
      %25 = vector.load %arg7[%c0_18, %c0_19] : memref<16x128xf32, #tpu.memory_space<vmem>>, vector<16x128xf32>
      tpu.vector_store %arg7[%c0_18, %c0_19], %24 {strides = array<i32>} : memref<16x128xf32, #tpu.memory_space<vmem>>, vector<16x128xf32>,
    } else {
    }
    %c0 = arith.constant 0 : index
    %c0_1 = arith.constant 0 : index
    %3 = vector.load %arg2[%c0, %c0_1] : memref<16x128xbf16, #tpu.memory_space<vmem>>, vector<16x128xbf16>
    %c0_2 = arith.constant 0 : index
    %c0_3 = arith.constant 0 : index
    %4 = vector.load %arg3[%c0_2, %c0_3] : memref<128x256xbf16, #tpu.memory_space<vmem>>, vector<128x256xbf16>
    %cst = arith.constant dense<0.000000e+00> : vector<16x256xf32>
    %5 = tpu.matmul %3, %4, %cst {dimension_numbers = #tpu.dot_dimension_numbers<[1], [0], [0], [1], [0, 0, 1, 1], [], []>} : vector<16x128xbf16>, vector<128x256xbf16>, vector<16x256xf32> -> vector<16x256xf32>
    %c0_4 = arith.constant 0 : index
    %c0_5 = arith.constant 0 : index
    %6 = vector.load %arg4[%c0_4, %c0_5] : memref<128x256xbf16, #tpu.memory_space<vmem>>, vector<128x256xbf16>
    %cst_6 = arith.constant dense<0.000000e+00> : vector<16x256xf32>
    %7 = tpu.matmul %3, %6, %cst_6 {dimension_numbers = #tpu.dot_dimension_numbers<[1], [0], [0], [1], [0, 0, 1, 1], [], []>} : vector<16x128xbf16>, vector<128x256xbf16>, vector<16x256xf32> -> vector<16x256xf32>
    %8 = arith.negf %5 : vector<16x256xf32>
    %9 = math.exp %8 : vector<16x256xf32>
    %cst_7 = arith.constant 1.000000e+00 : f32
    %10 = vector.broadcast %cst_7 : f32 to vector<16x256xf32>
    %11 = arith.addf %10, %9 : vector<16x256xf32>
    %12 = arith.divf %10, %11 : vector<16x256xf32>
    %13 = arith.mulf %5, %12 : vector<16x256xf32>
    %14 = arith.mulf %13, %7 : vector<16x256xf32>
    %c0_8 = arith.constant 0 : index
    %c0_9 = arith.constant 0 : index
    %15 = vector.load %arg7[%c0_8, %c0_9] : memref<16x128xf32, #tpu.memory_space<vmem>>, vector<16x128xf32>
    %16 = arith.truncf %14 : vector<16x256xf32> to vector<16x256xbf16>
    %c0_10 = arith.constant 0 : index
    %c0_11 = arith.constant 0 : index
    %17 = vector.load %arg5[%c0_10, %c0_11] : memref<256x128xbf16, #tpu.memory_space<vmem>>, vector<256x128xbf16>
    %cst_12 = arith.constant dense<0.000000e+00> : vector<16x128xf32>
    %18 = tpu.matmul %16, %17, %cst_12 {dimension_numbers = #tpu.dot_dimension_numbers<[1], [0], [0], [1], [0, 0, 1, 1], [], []>} : vector<16x256xbf16>, vector<256x128xbf16>, vector<16x128xf32> -> vector<16x128xf32>
    %19 = arith.addf %15, %18 : vector<16x128xf32>
    %c0_13 = arith.constant 0 : index
    %c0_14 = arith.constant 0 : index
    %20 = vector.load %arg7[%c0_13, %c0_14] : memref<16x128xf32, #tpu.memory_space<vmem>>, vector<16x128xf32>
    tpu.vector_store %arg7[%c0_13, %c0_14], %19 {strides = array<i32>} : memref<16x128xf32, #tpu.memory_space<vmem>>, vector<16x128xf32>,
    %c0_i32_15 = arith.constant 0 : i32
    %21 = arith.cmpi eq, %arg1, %c0_i32_15 : i32
    %22 = arith.extui %21 : i1 to i32
    %c0_i32_16 = arith.constant 0 : i32
    %23 = arith.cmpi ne, %22, %c0_i32_16 : i32
    scf.if %23 {
      %c0_17 = arith.constant 0 : index
      %c0_18 = arith.constant 0 : index
      %24 = vector.load %arg7[%c0_17, %c0_18] : memref<16x128xf32, #tpu.memory_space<vmem>>, vector<16x128xf32>
      %25 = arith.truncf %24 : vector<16x128xf32> to vector<16x128xbf16>
      %c0_19 = arith.constant 0 : index
      %c0_20 = arith.constant 0 : index
      %26 = vector.load %arg6[%c0_19, %c0_20] : memref<16x128xbf16, #tpu.memory_space<vmem>>, vector<16x128xbf16>
      tpu.vector_store %arg6[%c0_19, %c0_20], %25 {strides = array<i32>} : memref<16x128xbf16, #tpu.memory_space<vmem>>, vector<16x128xbf16>,
    } else {
    }
    return
  }
  func.func @transform_0(%arg0: i32, %arg1: i32) -> (i32, i32) {
    %c0_i32 = arith.constant 0 : i32
    %c0_i32_0 = arith.constant 0 : i32
    return %arg0, %c0_i32 : i32, i32
  }
  func.func @transform_1(%arg0: i32, %arg1: i32) -> (i32, i32) {
    %c0_i32 = arith.constant 0 : i32
    %c0_i32_0 = arith.constant 0 : i32
    return %c0_i32, %arg1 : i32, i32
  }
  func.func @transform_2(%arg0: i32, %arg1: i32) -> (i32, i32) {
    %c0_i32 = arith.constant 0 : i32
    %c0_i32_0 = arith.constant 0 : i32
    return %c0_i32, %arg1 : i32, i32
  }
  func.func @transform_3(%arg0: i32, %arg1: i32) -> (i32, i32) {
    %c0_i32 = arith.constant 0 : i32
    %c0_i32_0 = arith.constant 0 : i32
    return %arg1, %c0_i32 : i32, i32
  }
  func.func @transform_4(%arg0: i32, %arg1: i32) -> (i32, i32) {
    %c0_i32 = arith.constant 0 : i32
    %c0_i32_0 = arith.constant 0 : i32
    return %arg0, %c0_i32 : i32, i32
  }
}

</mosaic_0001>

<llo_original>
// kernel: _mlp_pallas.1
$region0: #{_mlp_pallas.1}
  #allocation0 [shape = 'u32[]', space=smem, size = 0x4, offset = 0x4, fixed_abs, tag = 'smem constant byte address 0x4 - core index']
  #allocation1 [shape = 'u32[144,128]{1,0:T(1,128)}', space=vmem, size = 0x12000, scoped, tag = 'internal scratch']
  #allocation2 [shape = 'f32[16,128]{1,0:T(8,128)}', space=vmem, size = 0x2000, scoped, tag = 'scratch operand']
  %s0 = inlined_call_operand.hbm [shape: bf16[16,128], index: 0, kind: input, shape index: {}]
  %s1 = inlined_call_operand.hbm [shape: bf16[128,256], index: 1, kind: input, shape index: {}]
  %s2 = inlined_call_operand.hbm [shape: bf16[128,256], index: 2, kind: input, shape index: {}]
  %s3 = inlined_call_operand.hbm [shape: bf16[256,128], index: 3, kind: input, shape index: {}]
  %s4 = inlined_call_operand.hbm [shape: bf16[16,128], index: 4, kind: output, shape index: {}]
  %s5 = sld [smem:[#allocation0]]
  $region50: #{_mlp_pallas.1} parent=0
    _
  %s7 = ssub.s32 1, %s5
  %s8 = scalar_select 0, %s7, %s5
  $region1: #{_mlp_pallas.1} parent=0
    #allocation3 [shape = 'u8[4096]{0}', space=vmem, size = 0x1000, scoped, tag = 'input window, operand 0, single buffered']
    #allocation4 [shape = 's32[1]{0}', space=sflag, size = 0x4, scoped, tag = 'scoped memory for _mlp_pallas.1']
    #allocation5 [shape = 's32[1]{0}', space=sflag, size = 0x4, scoped, tag = 'scoped memory for _mlp_pallas.1']
    #allocation6 [shape = 'u8[65536]{0}', space=vmem, size = 0x10000, scoped, tag = 'input window, operand 1, single buffered']
    #allocation7 [shape = 's32[1]{0}', space=sflag, size = 0x4, scoped, tag = 'scoped memory for _mlp_pallas.1']
    #allocation8 [shape = 'u8[65536]{0}', space=vmem, size = 0x10000, scoped, tag = 'input window, operand 2, single buffered']
    #allocation9 [shape = 'u8[65536]{0}', space=vmem, size = 0x10000, scoped, tag = 'input window, operand 3, single buffered']
    #allocation10 [shape = 's32[1]{0}', space=sflag, size = 0x4, scoped, tag = 'scoped memory for _mlp_pallas.1']
    #allocation11 [shape = 'u8[4096]{0}', space=vmem, size = 0x1000, scoped, tag = 'output window, operand 0, single buffered']
    %9 = vsyncpa [#allocation4], 0
    %10 = vsyncpa [#allocation7], 0
    %11 = vsyncpa [#allocation10], 0
    %12 = vsyncpa [#allocation5], 0
    // Predicated region
    $region2: #{_mlp_pallas.1} parent=1 // pred_check
      _
    $region3: #{_mlp_pallas.1} parent=1 // pred_check_branch
      %14 = sbr.rel (0) target = $region5
    $region4: #{_mlp_pallas.1} parent=1 // pred_region
      %s16 = ssub.s32 128, 128
      %17 = vsyncadd [#allocation4], %s16
      %s18 = sshll.u32 [#allocation3], 4
      %s19 = int_to_ptr.vmem [resolvable:$true] %s18
      %24 = dma.hbm_to_vmem [thread:$0]  %s0, 128, %s19, [#allocation4], 64, 64, 4
    $region5: #{_mlp_pallas.1} parent=1 // pred_fallthru
      _
    // Predicated region
    $region6: #{_mlp_pallas.1} parent=1 // pred_check
      _
    $region7: #{_mlp_pallas.1} parent=1 // pred_check_branch
      %26 = sbr.rel (0) target = $region9
    $region8: #{_mlp_pallas.1} parent=1 // pred_region
      %s28 = ssub.s32 2048, 2048
      %29 = vsyncadd [#allocation7], %s28
      %s30 = sshll.u32 [#allocation6], 4
      %s31 = int_to_ptr.vmem [resolvable:$true] %s30
      %36 = dma.hbm_to_vmem [thread:$0]  %s1, 2048, %s31, [#allocation7], 128, 128, 8
    $region9: #{_mlp_pallas.1} parent=1 // pred_fallthru
      _
    // Predicated region
    $region10: #{_mlp_pallas.1} parent=1 // pred_check
      _
    $region11: #{_mlp_pallas.1} parent=1 // pred_check_branch
      %38 = sbr.rel (0) target = $region13
    $region12: #{_mlp_pallas.1} parent=1 // pred_region
      %s40 = ssub.s32 2048, 2048
      %41 = vsyncadd [#allocation7], %s40
      %s42 = sshll.u32 [#allocation8], 4
      %s43 = int_to_ptr.vmem [resolvable:$true] %s42
      %48 = dma.hbm_to_vmem [thread:$0]  %s2, 2048, %s43, [#allocation7], 128, 128, 8
    $region13: #{_mlp_pallas.1} parent=1 // pred_fallthru
      _
    // Predicated region
    $region14: #{_mlp_pallas.1} parent=1 // pred_check
      _
    $region15: #{_mlp_pallas.1} parent=1 // pred_check_branch
      %50 = sbr.rel (0) target = $region17
    $region16: #{_mlp_pallas.1} parent=1 // pred_region
      %s52 = ssub.s32 2048, 2048
      %53 = vsyncadd [#allocation10], %s52
      %s54 = sshll.u32 [#allocation9], 4
      %s55 = int_to_ptr.vmem [resolvable:$true] %s54
      %60 = dma.hbm_to_vmem [thread:$0]  %s3, 2048, %s55, [#allocation10], 64, 64, 4
    $region17: #{_mlp_pallas.1} parent=1 // pred_fallthru
      _
    // Predicated region
    $region18: #{_mlp_pallas.1} parent=1 // pred_check
      _
    $region19: #{_mlp_pallas.1} parent=1 // pred_check_branch
      %62 = sbr.rel (0) target = $region21
    $region20: #{_mlp_pallas.1} parent=1 // pred_region
      %63 = dma.done [#allocation4], 128
    $region21: #{_mlp_pallas.1} parent=1 // pred_fallthru
      _
    // Predicated region
    $region22: #{_mlp_pallas.1} parent=1 // pred_check
      _
    $region23: #{_mlp_pallas.1} parent=1 // pred_check_branch
      %65 = sbr.rel (0) target = $region25
    $region24: #{_mlp_pallas.1} parent=1 // pred_region
      %66 = dma.done [#allocation7], 2048
    $region25: #{_mlp_pallas.1} parent=1 // pred_fallthru
      _
    // Predicated region
    $region26: #{_mlp_pallas.1} parent=1 // pred_check
      _
    $region27: #{_mlp_pallas.1} parent=1 // pred_check_branch
      %68 = sbr.rel (0) target = $region29
    $region28: #{_mlp_pallas.1} parent=1 // pred_region
      %69 = dma.done [#allocation7], 2048
    $region29: #{_mlp_pallas.1} parent=1 // pred_fallthru
      _
    // Predicated region
    $region30: #{_mlp_pallas.1} parent=1 // pred_check
      _
    $region31: #{_mlp_pallas.1} parent=1 // pred_check_branch
      %71 = sbr.rel (0) target = $region33
    $region32: #{_mlp_pallas.1} parent=1 // pred_region
      %72 = dma.done [#allocation10], 2048
    $region33: #{_mlp_pallas.1} parent=1 // pred_fallthru
      _
    %p74 = scmp.eq.s32.totalorder 0, 0
    // Predicated region
    $region34: #{_mlp_pallas.1} parent=1 // pred_check
      %p75 = pneg %p74
    $region35: #{_mlp_pallas.1} parent=1 // pred_check_branch
      %77 = sbr.rel (%p75) target = $region37
    $region36: #{_mlp_pallas.1} parent=1 // pred_region
      %78 = vst [vmem:[#allocation2] sm:$0xff] 0.0
      %79 = vst [vmem:[#allocation2 + $0x8] sm:$0xff] 0.0
    $region37: #{_mlp_pallas.1} parent=1 // pred_fallthru
      _
    %v80 = vld [vmem:[#allocation3] sm:$0xf]
    %v81 = vld [vmem:[#allocation3 + $0x4] sm:$0xf]
    %v82 = vld [vmem:[#allocation6] sm:$0xff]
    %v83 = vld [vmem:[#allocation6 + $0x8] sm:$0xff]
    %v84 = vld [vmem:[#allocation6 + $0x10] sm:$0xff]
    %v85 = vld [vmem:[#allocation6 + $0x18] sm:$0xff]
    %v86 = vld [vmem:[#allocation6 + $0x20] sm:$0xff]
    %v87 = vld [vmem:[#allocation6 + $0x28] sm:$0xff]
    %v88 = vld [vmem:[#allocation6 + $0x30] sm:$0xff]
    %v89 = vld [vmem:[#allocation6 + $0x38] sm:$0xff]
    %v90 = vld [vmem:[#allocation6 + $0x40] sm:$0xff]
    %v91 = vld [vmem:[#allocation6 + $0x48] sm:$0xff]
    %v92 = vld [vmem:[#allocation6 + $0x50] sm:$0xff]
    %v93 = vld [vmem:[#allocation6 + $0x58] sm:$0xff]
    %v94 = vld [vmem:[#allocation6 + $0x60] sm:$0xff]
    %v95 = vld [vmem:[#allocation6 + $0x68] sm:$0xff]
    %v96 = vld [vmem:[#allocation6 + $0x70] sm:$0xff]
    %v97 = vld [vmem:[#allocation6 + $0x78] sm:$0xff]
    %v100 = vunpack.c.l.b16 %v80
    %v101 = vunpack.c.l.b16 %v81
    %v102 = vpack.c.b16 %v101, %v100
    %v120 = vunpack.c.l.b16 %v82
    %v121 = vunpack.c.h.b16 %v82
    %v122 = vunpack.c.l.b16 %v83
    %v123 = vunpack.c.h.b16 %v83
    %v124 = vunpack.c.l.b16 %v84
    %v125 = vunpack.c.h.b16 %v84
    %v126 = vunpack.c.l.b16 %v85
    %v127 = vunpack.c.h.b16 %v85
    %v128 = vunpack.c.l.b16 %v86
    %v129 = vunpack.c.h.b16 %v86
    %v130 = vunpack.c.l.b16 %v87
    %v131 = vunpack.c.h.b16 %v87
    %v132 = vunpack.c.l.b16 %v88
    %v133 = vunpack.c.h.b16 %v88
    %v134 = vunpack.c.l.b16 %v89
    %v135 = vunpack.c.h.b16 %v89
    %v136 = vunpack.c.l.b16 %v90
    %v137 = vunpack.c.h.b16 %v90
    %v138 = vunpack.c.l.b16 %v91
    %v139 = vunpack.c.h.b16 %v91
    %v140 = vunpack.c.l.b16 %v92
    %v141 = vunpack.c.h.b16 %v92
    %v142 = vunpack.c.l.b16 %v93
    %v143 = vunpack.c.h.b16 %v93
    %v144 = vunpack.c.l.b16 %v94
    %v145 = vunpack.c.h.b16 %v94
    %v146 = vunpack.c.l.b16 %v95
    %v147 = vunpack.c.h.b16 %v95
    %v148 = vunpack.c.l.b16 %v96
    %v149 = vunpack.c.h.b16 %v96
    %v150 = vunpack.c.l.b16 %v97
    %v151 = vunpack.c.h.b16 %v97
    %v152 = vpack.c.b16 %v122, %v120
    %v153 = vpack.c.b16 %v123, %v121
    %v154 = vpack.c.b16 %v126, %v124
    %v155 = vpack.c.b16 %v127, %v125
    %v156 = vpack.c.b16 %v130, %v128
    %v157 = vpack.c.b16 %v131, %v129
    %v158 = vpack.c.b16 %v134, %v132
    %v159 = vpack.c.b16 %v135, %v133
    %v160 = vpack.c.b16 %v138, %v136
    %v161 = vpack.c.b16 %v139, %v137
    %v162 = vpack.c.b16 %v142, %v140
    %v163 = vpack.c.b16 %v143, %v141
    %v164 = vpack.c.b16 %v146, %v144
    %v165 = vpack.c.b16 %v147, %v145
    %v166 = vpack.c.b16 %v150, %v148
    %v167 = vpack.c.b16 %v151, %v149
    %184 = vmatprep.subr.bf16.mxu0 %v167
    %185 = vmatpush1.bf16.msra.mxu0 %v166
    %186 = vmatprep.subr.bf16.mxu0 %v165
    %187 = vmatpush1.bf16.msra.mxu0 %v164
    %188 = vmatprep.subr.bf16.mxu0 %v163
    %189 = vmatpush1.bf16.msra.mxu0 %v162
    %190 = vmatprep.subr.bf16.mxu0 %v161
    %191 = vmatpush1.bf16.msra.mxu0 %v160
    %192 = vmatprep.subr.bf16.mxu0 %v159
    %193 = vmatpush1.bf16.msra.mxu0 %v158
    %194 = vmatprep.subr.bf16.mxu0 %v157
    %195 = vmatpush1.bf16.msra.mxu0 %v156
    %196 = vmatprep.subr.bf16.mxu0 %v155
    %197 = vmatpush1.bf16.msra.mxu0 %v154
    %198 = vmatprep.subr.bf16.mxu0 %v153
    %199 = vmatpush1.bf16.msra.mxu0 %v152
    %200 = vmatprep.subr.bf16.mxu0 0
    %201 = vmatpush2.bf16.msra.mxu0 0
    %202 = vmatprep.subr.bf16.mxu0 0
    %203 = vmatpush2.bf16.msra.mxu0 0
    %204 = vmatprep.subr.bf16.mxu0 0
    %205 = vmatpush2.bf16.msra.mxu0 0
    %206 = vmatprep.subr.bf16.mxu0 0
    %207 = vmatpush2.bf16.msra.mxu0 0
    %208 = vmatprep.subr.bf16.mxu0 0
    %209 = vmatpush2.bf16.msra.mxu0 0
    %210 = vmatprep.subr.bf16.mxu0 0
    %211 = vmatpush2.bf16.msra.mxu0 0
    %212 = vmatprep.subr.bf16.mxu0 0
    %213 = vmatpush2.bf16.msra.mxu0 0
    %214 = vmatprep.subr.bf16.mxu0 0
    %215 = vmatpush2.bf16.msra.mxu0 0
    %216 = vmatprep.mubr.bf16.mxu0 0
    %217 = vmatmul.mubr.bf16.gmra.mxu0 %v102
    %v218 = vpop.f32.mrf.mxu0
    %v219 = vadd.f32 0.0, %v218
    %v220 = vpop.f32.mrf.mxu0
    %v221 = vadd.f32 0.0, %v220
    %v222 = vpop.f32.mrf.mxu0
    %v223 = vadd.f32 0.0, %v222
    %v224 = vpop.f32.mrf.mxu0
    %v225 = vadd.f32 0.0, %v224
    %226 = vdwg.mxu0
    %v227 = vld [vmem:[#allocation8] sm:$0xff]
    %v228 = vld [vmem:[#allocation8 + $0x8] sm:$0xff]
    %v229 = vld [vmem:[#allocation8 + $0x10] sm:$0xff]
    %v230 = vld [vmem:[#allocation8 + $0x18] sm:$0xff]
    %v231 = vld [vmem:[#allocation8 + $0x20] sm:$0xff]
    %v232 = vld [vmem:[#allocation8 + $0x28] sm:$0xff]
    %v233 = vld [vmem:[#allocation8 + $0x30] sm:$0xff]
    %v234 = vld [vmem:[#allocation8 + $0x38] sm:$0xff]
    %v235 = vld [vmem:[#allocation8 + $0x40] sm:$0xff]
    %v236 = vld [vmem:[#allocation8 + $0x48] sm:$0xff]
    %v237 = vld [vmem:[#allocation8 + $0x50] sm:$0xff]
    %v238 = vld [vmem:[#allocation8 + $0x58] sm:$0xff]
    %v239 = vld [vmem:[#allocation8 + $0x60] sm:$0xff]
    %v240 = vld [vmem:[#allocation8 + $0x68] sm:$0xff]
    %v241 = vld [vmem:[#allocation8 + $0x70] sm:$0xff]
    %v242 = vld [vmem:[#allocation8 + $0x78] sm:$0xff]
    %v259 = vunpack.c.l.b16 %v227
    %v260 = vunpack.c.h.b16 %v227
    %v261 = vunpack.c.l.b16 %v228
    %v262 = vunpack.c.h.b16 %v228
    %v263 = vunpack.c.l.b16 %v229
    %v264 = vunpack.c.h.b16 %v229
    %v265 = vunpack.c.l.b16 %v230
    %v266 = vunpack.c.h.b16 %v230
    %v267 = vunpack.c.l.b16 %v231
    %v268 = vunpack.c.h.b16 %v231
    %v269 = vunpack.c.l.b16 %v232
    %v270 = vunpack.c.h.b16 %v232
    %v271 = vunpack.c.l.b16 %v233
    %v272 = vunpack.c.h.b16 %v233
    %v273 = vunpack.c.l.b16 %v234
    %v274 = vunpack.c.h.b16 %v234
    %v275 = vunpack.c.l.b16 %v235
    %v276 = vunpack.c.h.b16 %v235
    %v277 = vunpack.c.l.b16 %v236
    %v278 = vunpack.c.h.b16 %v236
    %v279 = vunpack.c.l.b16 %v237
    %v280 = vunpack.c.h.b16 %v237
    %v281 = vunpack.c.l.b16 %v238
    %v282 = vunpack.c.h.b16 %v238
    %v283 = vunpack.c.l.b16 %v239
    %v284 = vunpack.c.h.b16 %v239
    %v285 = vunpack.c.l.b16 %v240
    %v286 = vunpack.c.h.b16 %v240
    %v287 = vunpack.c.l.b16 %v241
    %v288 = vunpack.c.h.b16 %v241
    %v289 = vunpack.c.l.b16 %v242
    %v290 = vunpack.c.h.b16 %v242
    %v291 = vpack.c.b16 %v261, %v259
    %v292 = vpack.c.b16 %v262, %v260
    %v293 = vpack.c.b16 %v265, %v263
    %v294 = vpack.c.b16 %v266, %v264
    %v295 = vpack.c.b16 %v269, %v267
    %v296 = vpack.c.b16 %v270, %v268
    %v297 = vpack.c.b16 %v273, %v271
    %v298 = vpack.c.b16 %v274, %v272
    %v299 = vpack.c.b16 %v277, %v275
    %v300 = vpack.c.b16 %v278, %v276
    %v301 = vpack.c.b16 %v281, %v279
    %v302 = vpack.c.b16 %v282, %v280
    %v303 = vpack.c.b16 %v285, %v283
    %v304 = vpack.c.b16 %v286, %v284
    %v305 = vpack.c.b16 %v289, %v287
    %v306 = vpack.c.b16 %v290, %v288
    %323 = vmatprep.subr.bf16.mxu0 %v306
    %324 = vmatpush1.bf16.msra.mxu0 %v305
    %325 = vmatprep.subr.bf16.mxu0 %v304
    %326 = vmatpush1.bf16.msra.mxu0 %v303
    %327 = vmatprep.subr.bf16.mxu0 %v302
    %328 = vmatpush1.bf16.msra.mxu0 %v301
    %329 = vmatprep.subr.bf16.mxu0 %v300
    %330 = vmatpush1.bf16.msra.mxu0 %v299
    %331 = vmatprep.subr.bf16.mxu0 %v298
    %332 = vmatpush1.bf16.msra.mxu0 %v297
    %333 = vmatprep.subr.bf16.mxu0 %v296
    %334 = vmatpush1.bf16.msra.mxu0 %v295
    %335 = vmatprep.subr.bf16.mxu0 %v294
    %336 = vmatpush1.bf16.msra.mxu0 %v293
    %337 = vmatprep.subr.bf16.mxu0 %v292
    %338 = vmatpush1.bf16.msra.mxu0 %v291
    %339 = vmatprep.subr.bf16.mxu0 0
    %340 = vmatpush2.bf16.msra.mxu0 0
    %341 = vmatprep.subr.bf16.mxu0 0
    %342 = vmatpush2.bf16.msra.mxu0 0
    %343 = vmatprep.subr.bf16.mxu0 0
    %344 = vmatpush2.bf16.msra.mxu0 0
    %345 = vmatprep.subr.bf16.mxu0 0
    %346 = vmatpush2.bf16.msra.mxu0 0
    %347 = vmatprep.subr.bf16.mxu0 0
    %348 = vmatpush2.bf16.msra.mxu0 0
    %349 = vmatprep.subr.bf16.mxu0 0
    %350 = vmatpush2.bf16.msra.mxu0 0
    %351 = vmatprep.subr.bf16.mxu0 0
    %352 = vmatpush2.bf16.msra.mxu0 0
    %353 = vmatprep.subr.bf16.mxu0 0
    %354 = vmatpush2.bf16.msra.mxu0 0
    %355 = vmatprep.mubr.bf16.mxu0 0
    %356 = vmatmul.mubr.bf16.gmra.mxu0 %v102
    %v357 = vpop.f32.mrf.mxu0
    %v358 = vadd.f32 0.0, %v357
    %v359 = vpop.f32.mrf.mxu0
    %v360 = vadd.f32 0.0, %v359
    %v361 = vpop.f32.mrf.mxu0
    %v362 = vadd.f32 0.0, %v361
    %v363 = vpop.f32.mrf.mxu0
    %v364 = vadd.f32 0.0, %v363
    %365 = vdwg.mxu0
    %v366 = vxor.u32 %v219, 2147483648
    %v367 = vxor.u32 %v221, 2147483648
    %v368 = vxor.u32 %v223, 2147483648
    %v369 = vxor.u32 %v225, 2147483648
    %v370 = vmul.f32 %v366, 1.442695
    %v371 = vpow.pop %v370
    %v372 = vmul.f32 %v367, 1.442695
    %v373 = vpow.pop %v372
    %v374 = vmul.f32 %v368, 1.442695
    %v375 = vpow.pop %v374
    %v376 = vmul.f32 %v369, 1.442695
    %v377 = vpow.pop %v376
    %v378 = vadd.f32 %v371, 1.0
    %v379 = vadd.f32 %v373, 1.0
    %v380 = vadd.f32 %v375, 1.0
    %v381 = vadd.f32 %v377, 1.0
    %v382 = vrcp.pop %v378
    %v383 = vmul.f32 1.0, %v382
    %v384 = vrcp.pop %v379
    %v385 = vmul.f32 1.0, %v384
    %v386 = vrcp.pop %v380
    %v387 = vmul.f32 1.0, %v386
    %v388 = vrcp.pop %v381
    %v389 = vmul.f32 1.0, %v388
    %v390 = vmul.f32 %v219, %v383
    %v391 = vmul.f32 %v221, %v385
    %v392 = vmul.f32 %v223, %v387
    %v393 = vmul.f32 %v225, %v389
    %v394 = vmul.f32 %v390, %v358
    %v395 = vmul.f32 %v391, %v360
    %v396 = vmul.f32 %v392, %v362
    %v397 = vmul.f32 %v393, %v364
    %v398 = vld [vmem:[#allocation2] sm:$0xff]
    %v399 = vld [vmem:[#allocation2 + $0x8] sm:$0xff]
    %v400 = vpack.c.bf16 %v396, %v394
    %v401 = vpack.c.bf16 %v397, %v395
    %v402 = vld [vmem:[#allocation9] sm:$0xf]
    %v403 = vld [vmem:[#allocation9 + $0x4] sm:$0xf]
    %v404 = vld [vmem:[#allocation9 + $0x8] sm:$0xf]
    %v405 = vld [vmem:[#allocation9 + $0xc] sm:$0xf]
    %v406 = vld [vmem:[#allocation9 + $0x10] sm:$0xf]
    %v407 = vld [vmem:[#allocation9 + $0x14] sm:$0xf]
    %v408 = vld [vmem:[#allocation9 + $0x18] sm:$0xf]
    %v409 = vld [vmem:[#allocation9 + $0x1c] sm:$0xf]
    %v410 = vld [vmem:[#allocation9 + $0x20] sm:$0xf]
    %v411 = vld [vmem:[#allocation9 + $0x24] sm:$0xf]
    %v412 = vld [vmem:[#allocation9 + $0x28] sm:$0xf]
    %v413 = vld [vmem:[#allocation9 + $0x2c] sm:$0xf]
    %v414 = vld [vmem:[#allocation9 + $0x30] sm:$0xf]
    %v415 = vld [vmem:[#allocation9 + $0x34] sm:$0xf]
    %v416 = vld [vmem:[#allocation9 + $0x38] sm:$0xf]
    %v417 = vld [vmem:[#allocation9 + $0x3c] sm:$0xf]
    %v418 = vld [vmem:[#allocation9 + $0x40] sm:$0xf]
    %v419 = vld [vmem:[#allocation9 + $0x44] sm:$0xf]
    %v420 = vld [vmem:[#allocation9 + $0x48] sm:$0xf]
    %v421 = vld [vmem:[#allocation9 + $0x4c] sm:$0xf]
    %v422 = vld [vmem:[#allocation9 + $0x50] sm:$0xf]
    %v423 = vld [vmem:[#allocation9 + $0x54] sm:$0xf]
    %v424 = vld [vmem:[#allocation9 + $0x58] sm:$0xf]
    %v425 = vld [vmem:[#allocation9 + $0x5c] sm:$0xf]
    %v426 = vld [vmem:[#allocation9 + $0x60] sm:$0xf]
    %v427 = vld [vmem:[#allocation9 + $0x64] sm:$0xf]
    %v428 = vld [vmem:[#allocation9 + $0x68] sm:$0xf]
    %v429 = vld [vmem:[#allocation9 + $0x6c] sm:$0xf]
    %v430 = vld [vmem:[#allocation9 + $0x70] sm:$0xf]
    %v431 = vld [vmem:[#allocation9 + $0x74] sm:$0xf]
    %v432 = vld [vmem:[#allocation9 + $0x78] sm:$0xf]
    %v433 = vld [vmem:[#allocation9 + $0x7c] sm:$0xf]
    %v466 = vunpack.c.l.b16 %v402
    %v467 = vunpack.c.l.b16 %v403
    %v468 = vunpack.c.l.b16 %v404
    %v469 = vunpack.c.l.b16 %v405
    %v470 = vunpack.c.l.b16 %v406
    %v471 = vunpack.c.l.b16 %v407
    %v472 = vunpack.c.l.b16 %v408
    %v473 = vunpack.c.l.b16 %v409
    %v474 = vunpack.c.l.b16 %v410
    %v475 = vunpack.c.l.b16 %v411
    %v476 = vunpack.c.l.b16 %v412
    %v477 = vunpack.c.l.b16 %v413
    %v478 = vunpack.c.l.b16 %v414
    %v479 = vunpack.c.l.b16 %v415
    %v480 = vunpack.c.l.b16 %v416
    %v481 = vunpack.c.l.b16 %v417
    %v482 = vunpack.c.l.b16 %v418
    %v483 = vunpack.c.l.b16 %v419
    %v484 = vunpack.c.l.b16 %v420
    %v485 = vunpack.c.l.b16 %v421
    %v486 = vunpack.c.l.b16 %v422
    %v487 = vunpack.c.l.b16 %v423
    %v488 = vunpack.c.l.b16 %v424
    %v489 = vunpack.c.l.b16 %v425
    %v490 = vunpack.c.l.b16 %v426
    %v491 = vunpack.c.l.b16 %v427
    %v492 = vunpack.c.l.b16 %v428
    %v493 = vunpack.c.l.b16 %v429
    %v494 = vunpack.c.l.b16 %v430
    %v495 = vunpack.c.l.b16 %v431
    %v496 = vunpack.c.l.b16 %v432
    %v497 = vunpack.c.l.b16 %v433
    %v498 = vpack.c.b16 %v467, %v466
    %v499 = vpack.c.b16 %v469, %v468
    %v500 = vpack.c.b16 %v471, %v470
    %v501 = vpack.c.b16 %v473, %v472
    %v502 = vpack.c.b16 %v475, %v474
    %v503 = vpack.c.b16 %v477, %v476
    %v504 = vpack.c.b16 %v479, %v478
    %v505 = vpack.c.b16 %v481, %v480
    %v506 = vpack.c.b16 %v483, %v482
    %v507 = vpack.c.b16 %v485, %v484
    %v508 = vpack.c.b16 %v487, %v486
    %v509 = vpack.c.b16 %v489, %v488
    %v510 = vpack.c.b16 %v491, %v490
    %v511 = vpack.c.b16 %v493, %v492
    %v512 = vpack.c.b16 %v495, %v494
    %v513 = vpack.c.b16 %v497, %v496
    %530 = vmatprep.subr.bf16.mxu0 0
    %531 = vmatpush1.bf16.msra.mxu0 %v505
    %532 = vmatprep.subr.bf16.mxu0 0
    %533 = vmatpush1.bf16.msra.mxu0 %v504
    %534 = vmatprep.subr.bf16.mxu0 0
    %535 = vmatpush1.bf16.msra.mxu0 %v503
    %536 = vmatprep.subr.bf16.mxu0 0
    %537 = vmatpush1.bf16.msra.mxu0 %v502
    %538 = vmatprep.subr.bf16.mxu0 0
    %539 = vmatpush1.bf16.msra.mxu0 %v501
    %540 = vmatprep.subr.bf16.mxu0 0
    %541 = vmatpush1.bf16.msra.mxu0 %v500
    %542 = vmatprep.subr.bf16.mxu0 0
    %543 = vmatpush1.bf16.msra.mxu0 %v499
    %544 = vmatprep.subr.bf16.mxu0 0
    %545 = vmatpush1.bf16.msra.mxu0 %v498
    %546 = vmatprep.subr.bf16.mxu0 0
    %547 = vmatpush2.bf16.msra.mxu0 %v513
    %548 = vmatprep.subr.bf16.mxu0 0
    %549 = vmatpush2.bf16.msra.mxu0 %v512
    %550 = vmatprep.subr.bf16.mxu0 0
    %551 = vmatpush2.bf16.msra.mxu0 %v511
    %552 = vmatprep.subr.bf16.mxu0 0
    %553 = vmatpush2.bf16.msra.mxu0 %v510
    %554 = vmatprep.subr.bf16.mxu0 0
    %555 = vmatpush2.bf16.msra.mxu0 %v509
    %556 = vmatprep.subr.bf16.mxu0 0
    %557 = vmatpush2.bf16.msra.mxu0 %v508
    %558 = vmatprep.subr.bf16.mxu0 0
    %559 = vmatpush2.bf16.msra.mxu0 %v507
    %560 = vmatprep.subr.bf16.mxu0 0
    %561 = vmatpush2.bf16.msra.mxu0 %v506
    %562 = vmatprep.mubr.bf16.mxu0 %v401
    %563 = vmatmul.mubr.bf16.gmra.mxu0 %v400
    %v564 = vpop.f32.mrf.mxu0
    %v565 = vadd.f32 0.0, %v564
    %v566 = vpop.f32.mrf.mxu0
    %v567 = vpop.f32.mrf.mxu0
    %v568 = vadd.f32 0.0, %v567
    %v569 = vpop.f32.mrf.mxu0
    %570 = vdwg.mxu0
    %v571 = vadd.f32 %v398, %v565
    %v572 = vadd.f32 %v399, %v568
    %573 = vst [vmem:[#allocation2] sm:$0xff] %v571
    %574 = vst [vmem:[#allocation2 + $0x8] sm:$0xff] %v572
    // Predicated region
    $region38: #{_mlp_pallas.1} parent=1 // pred_check
      %p575 = pneg %p74
    $region39: #{_mlp_pallas.1} parent=1 // pred_check_branch
      %577 = sbr.rel (%p575) target = $region41
    $region40: #{_mlp_pallas.1} parent=1 // pred_region
      %v578 = vld [vmem:[#allocation2] sm:$0xff]
      %v579 = vld [vmem:[#allocation2 + $0x8] sm:$0xff]
      %v580 = vpack.c.bf16 %v579, %v578
      %v582 = vunpack.c.l.b16 %v580
      %v583 = vunpack.c.h.b16 %v580
      %v584 = vpack.c.b16 %v582, %v582
      %v585 = vpack.c.b16 %v583, %v583
      %588 = vst [vmem:[#allocation11] sm:$0xf] %v584
      %589 = vst [vmem:[#allocation11 + $0x4] sm:$0xf] %v585
    $region41: #{_mlp_pallas.1} parent=1 // pred_fallthru
      _
    // Predicated region
    $region42: #{_mlp_pallas.1} parent=1 // pred_check
      _
    $region43: #{_mlp_pallas.1} parent=1 // pred_check_branch
      %591 = sbr.rel (0) target = $region45
    $region44: #{_mlp_pallas.1} parent=1 // pred_region
      %s593 = ssub.s32 128, 128
      %594 = vsyncadd [#allocation5], %s593
      %s595 = sshll.u32 [#allocation11], 4
      %s596 = int_to_ptr.vmem [resolvable:$true] %s595
      %601 = dma.vmem_to_hbm [thread:$0]  %s596, 128, %s4, [#allocation5], 64, 64, 4
    $region45: #{_mlp_pallas.1} parent=1 // pred_fallthru
      _
    // Predicated region
    $region46: #{_mlp_pallas.1} parent=1 // pred_check
      _
    $region47: #{_mlp_pallas.1} parent=1 // pred_check_branch
      %603 = sbr.rel (0) target = $region49
    $region48: #{_mlp_pallas.1} parent=1 // pred_region
      %604 = dma.done [#allocation5], 128
    $region49: #{_mlp_pallas.1} parent=1 // pred_fallthru
      _
    %605 = vsyncpa [#allocation4], 1
    %606 = vsyncpa [#allocation7], 1
    %607 = vsyncpa [#allocation10], 1
    %608 = vsyncpa [#allocation5], 1

</llo_original>
